<compile_context>
chip_gen: v5e
topology: v5e:2x2
jax: 0.10.0
libtpu: 0.0.40
codegen_flags: <defaults>
</compile_context>

<pallas_src>
import jax
import jax.numpy as jnp
from jax.experimental import pallas as pl
from jax.experimental.pallas import tpu as pltpu

L = 50  # optical aperture: rows, in_features, out_features must all be <= L


def _omm_kernel(w_max_ref, x_ref, w_ref, b_ref, o_ref):
    # w_max_ref: (1, 1) f32 in SMEM  -- max|W|, precomputed wrapper-side
    # x_ref:     (Bt, R, IN)         -- chunk of batch elements (raw input)
    # w_ref:     (IN, OUT)           -- |W|^T, precomputed wrapper-side
    # b_ref:     (1, OUT)            -- bias
    # o_ref:     (Bt, R, OUT)
    Bt, R, IN = x_ref.shape
    OUT = w_ref.shape[1]

    x = x_ref[...]
    w = w_ref[...]

    # per-batch SIGNED max over the raw input (matches norm_matrix_channel)
    x_max = jnp.max(jnp.max(x, axis=2, keepdims=True), axis=1, keepdims=True)  # (Bt,1,1)

    # One MXU-shaped matmul for the whole chunk.  Flatten is free when R % 8 == 0
    # (no (8,128) tile-boundary crossing); for unaligned R it is still correct,
    # just pays a VMEM relayout copy (prefer R a multiple of 8).
    x2d = x.reshape(Bt * R, IN)
    c = jax.lax.dot_general(
        x2d, w,
        dimension_numbers=(((1,), (0,)), ((), ())),   # contract IN with IN
        preferred_element_type=jnp.float32,
    ).reshape(Bt, R, OUT)
    c_abs = jnp.abs(c)

    # per-batch detector max
    c_max = jnp.max(jnp.max(c_abs, axis=2, keepdims=True), axis=1, keepdims=True)

    # fused per-batch scale + bias.  NOTE: c_max == 0 (all-zero input or weight)
    # yields NaN exactly like the reference's c / max(c) (degenerate case).
    scale = (x_max * w_max_ref[0, 0]) / c_max                     # (Bt,1,1)
    o_ref[...] = (c_abs * scale + b_ref[...]).astype(o_ref.dtype)


def omm_forward(x, weight, bias, *, block_rows=4096):
    B, R, IN = x.shape
    OUT, IN_w = weight.shape
    assert IN_w == IN
    assert R <= L and IN <= L and OUT <= L, "optical aperture is L x L"

    x = x.astype(jnp.float32)
    # Hoist the weight prep out of the per-step body (the weight block is
    # revisited every grid step): |W|^T as the matmul RHS, scalar max|W| to SMEM.
    w_eff = jnp.abs(weight).astype(jnp.float32).T          # (IN, OUT)
    w_max = jnp.max(w_eff).reshape(1, 1)                   # (1, 1) scalar
    bias = bias.astype(jnp.float32)

    # Batch-chunk blocking: ~block_rows flattened matmul rows per grid step
    # (memory-bound: big blocks amortise the ~0.35 us fixed per-step cost).
    max_rows = 8192                                        # VMEM cap (v7x: 64 MiB physical)
    Bt = max(1, min(B, min(block_rows, max_rows) // max(R, 1)))
    # keep >= 2 grid steps when possible so both v7x TensorCores get work
    if B >= 2 and pl.cdiv(B, Bt) < 2:
        Bt = pl.cdiv(B, 2)
    grid = pl.cdiv(B, Bt)   # ragged last block handled by Pallas (no batch padding)

    # VMEM budget: double-buffered x/out blocks (lane-padded to 128 in VMEM)
    # + in-kernel f32 intermediates + headroom; clamp to a v7x-safe ceiling.
    r8 = 8 * pl.cdiv(R, 8)
    x_blk = Bt * r8 * 128 * pl.cdiv(IN, 128) * 4
    o_blk = Bt * r8 * 128 * pl.cdiv(OUT, 128) * 4
    vmem_need = 2 * (x_blk + o_blk) + 2 * o_blk + (8 << 20)
    vmem_limit = int(min(max(vmem_need, 32 << 20), 48 << 20))

    out = pl.pallas_call(
        _omm_kernel,
        out_shape=jax.ShapeDtypeStruct((B, R, OUT), jnp.float32),
        grid_spec=pltpu.PrefetchScalarGridSpec(
            num_scalar_prefetch=0,
            grid=(grid,),
            in_specs=[
                pl.BlockSpec(memory_space=pltpu.MemorySpace.SMEM),   # w_max scalar
                pl.BlockSpec((Bt, R, IN), lambda b: (b, 0, 0)),
                pl.BlockSpec((IN, OUT), lambda b: (0, 0)),
                pl.BlockSpec((1, OUT), lambda b: (0, 0)),
            ],
            out_specs=pl.BlockSpec((Bt, R, OUT), lambda b: (b, 0, 0)),
        ),
        compiler_params=pltpu.CompilerParams(
            dimension_semantics=("parallel",),
            vmem_limit_bytes=vmem_limit,
        ),
        cost_estimate=pl.CostEstimate(
            flops=2 * B * R * IN * OUT,
            bytes_accessed=4 * (B * R * IN + IN * OUT + OUT + B * R * OUT),
            transcendentals=0,
        ),
    )(w_max, x, w_eff, bias)
    return out


def omm_ref(x, weight, bias):
    # pure-JAX reference of the intended semantics (for validation)
    w = jnp.abs(weight).T                                   # (IN, OUT)
    x_max = jnp.max(x, axis=(1, 2), keepdims=True)          # (B,1,1)
    w_max = jnp.max(w)
    x_n = x / (x_max + 1e-8)
    w_n = w / (w_max + 1e-8)
    c = jnp.abs(jnp.einsum("bri,io->bro", x_n, w_n))
    res = c / jnp.max(c, axis=(1, 2), keepdims=True)
    out = res * (x_max * w_max)
    return out + bias[None]                                 # bias broadcast over rows


if __name__ == "__main__":
    key = jax.random.PRNGKey(0)
    k_x, k_w, k_x2 = jax.random.split(key, 3)

    B, R, IN, OUT = 2, 8, 32, 16     # batch, rows, para_num_in, para_num_out (all <= L)

    x = jax.random.normal(k_x, (B, R, IN), dtype=jnp.float32)
    # omm.__init__: trunc_normal_(std=0.1) (bounds +-2 are ~+-20 sigma, effectively normal)
    weight = 0.1 * jax.random.normal(k_w, (OUT, IN), dtype=jnp.float32)
    bias = jnp.zeros((1, OUT), dtype=jnp.float32)

    y = omm_forward(x, weight, bias)
    jax.block_until_ready(y)
    y_ref = omm_ref(x, weight, bias)
    assert y.shape == (B, R, OUT)
    assert jnp.allclose(y, y_ref, atol=1e-5, rtol=1e-5), "mismatch vs reference"

    # exercise the multi-chunk path with a ragged last block (B % Bt != 0, no padding)
    B2 = 3
    x2 = jax.random.normal(k_x2, (B2, R, IN), dtype=jnp.float32)
    y2 = omm_forward(x2, weight, bias, block_rows=16)   # Bt=2 -> grid=2, ragged last block
    jax.block_until_ready(y2)
    y2_ref = omm_ref(x2, weight, bias)
    assert y2.shape == (B2, R, OUT)
    assert jnp.allclose(y2, y2_ref, atol=1e-5, rtol=1e-5), "mismatch vs reference (chunked)"

    print("KERNEL_OK")
</pallas_src>

<mosaic_0001>
module attributes {stable_mosaic.version = 11 : i64} {
  func.func @_omm_kernel(%arg0: i32, %arg1: memref<1x1xf32, #tpu.memory_space<smem>>, %arg2: memref<1x8x32xf32, #tpu.memory_space<vmem>>, %arg3: memref<32x16xf32, #tpu.memory_space<vmem>>, %arg4: memref<1x16xf32, #tpu.memory_space<vmem>>, %arg5: memref<1x8x16xf32, #tpu.memory_space<vmem>>) attributes {dimension_semantics = [#tpu.dimension_semantics<parallel>], iteration_bounds = array<i64: 2>, scalar_prefetch = 0 : i64, scratch_operands = 0 : i64, tpu.core_type = #tpu.core_type<tc>, window_params = [{transform_indices = @transform_0, window_bounds = array<i64: 1, 1>}, {transform_indices = @transform_1, window_bounds = array<i64: 1, 8, 32>}, {pipeline_mode = #tpu.pipeline_mode<synchronous>, transform_indices = @transform_2, window_bounds = array<i64: 32, 16>}, {pipeline_mode = #tpu.pipeline_mode<synchronous>, transform_indices = @transform_3, window_bounds = array<i64: 1, 16>}, {transform_indices = @transform_4, window_bounds = array<i64: 1, 8, 16>}]} {
    %c0 = arith.constant 0 : index
    %c0_0 = arith.constant 0 : index
    %c0_1 = arith.constant 0 : index
    %0 = vector.load %arg2[%c0, %c0_0, %c0_1] : memref<1x8x32xf32, #tpu.memory_space<vmem>>, vector<1x8x32xf32>
    %c0_2 = arith.constant 0 : index
    %c0_3 = arith.constant 0 : index
    %1 = vector.load %arg3[%c0_2, %c0_3] : memref<32x16xf32, #tpu.memory_space<vmem>>, vector<32x16xf32>
    %cst = arith.constant dense<0xFF800000> : vector<1x8xf32>
    %2 = vector.multi_reduction <maximumf>, %0, %cst [2] : vector<1x8x32xf32> to vector<1x8xf32>
    %3 = vector.shape_cast %2 : vector<1x8xf32> to vector<1x8x1xf32>
    %cst_4 = arith.constant dense<0xFF800000> : vector<1x1xf32>
    %4 = vector.multi_reduction <maximumf>, %3, %cst_4 [1] : vector<1x8x1xf32> to vector<1x1xf32>
    %5 = vector.shape_cast %4 : vector<1x1xf32> to vector<1x1x1xf32>
    %6 = vector.shape_cast %0 : vector<1x8x32xf32> to vector<8x32xf32>
    %cst_5 = arith.constant dense<0.000000e+00> : vector<8x16xf32>
    %7 = tpu.matmul %6, %1, %cst_5 {dimension_numbers = #tpu.dot_dimension_numbers<[1], [0], [0], [1], [0, 0, 1, 1], [], []>} : vector<8x32xf32>, vector<32x16xf32>, vector<8x16xf32> -> vector<8x16xf32>
    %8 = vector.shape_cast %7 : vector<8x16xf32> to vector<1x8x16xf32>
    %9 = math.absf %8 : vector<1x8x16xf32>
    %cst_6 = arith.constant dense<0xFF800000> : vector<1x8xf32>
    %10 = vector.multi_reduction <maximumf>, %9, %cst_6 [2] : vector<1x8x16xf32> to vector<1x8xf32>
    %11 = vector.shape_cast %10 : vector<1x8xf32> to vector<1x8x1xf32>
    %cst_7 = arith.constant dense<0xFF800000> : vector<1x1xf32>
    %12 = vector.multi_reduction <maximumf>, %11, %cst_7 [1] : vector<1x8x1xf32> to vector<1x1xf32>
    %13 = vector.shape_cast %12 : vector<1x1xf32> to vector<1x1x1xf32>
    %c0_8 = arith.constant 0 : index
    %c0_9 = arith.constant 0 : index
    %14 = memref.load %arg1[%c0_8, %c0_9] : memref<1x1xf32, #tpu.memory_space<smem>>
    %15 = vector.broadcast %14 : f32 to vector<1x1x1xf32>
    %16 = arith.mulf %5, %15 : vector<1x1x1xf32>
    %17 = arith.divf %16, %13 : vector<1x1x1xf32>
    %18 = vector.broadcast %17 : vector<1x1x1xf32> to vector<1x8x16xf32>
    %19 = arith.mulf %9, %18 : vector<1x8x16xf32>
    %c0_10 = arith.constant 0 : index
    %c0_11 = arith.constant 0 : index
    %20 = vector.load %arg4[%c0_10, %c0_11] : memref<1x16xf32, #tpu.memory_space<vmem>>, vector<1x16xf32>
    %21 = vector.shape_cast %20 : vector<1x16xf32> to vector<1x1x16xf32>
    %22 = vector.broadcast %21 : vector<1x1x16xf32> to vector<1x8x16xf32>
    %23 = arith.addf %19, %22 : vector<1x8x16xf32>
    %c0_12 = arith.constant 0 : index
    %c0_13 = arith.constant 0 : index
    %c0_14 = arith.constant 0 : index
    %24 = vector.load %arg5[%c0_12, %c0_13, %c0_14] : memref<1x8x16xf32, #tpu.memory_space<vmem>>, vector<1x8x16xf32>
    tpu.vector_store %arg5[%c0_12, %c0_13, %c0_14], %23 {strides = array<i32>} : memref<1x8x16xf32, #tpu.memory_space<vmem>>, vector<1x8x16xf32>,
    return
  }
  func.func @transform_0(%arg0: i32) -> (i32, i32) {
    %c0_i32 = arith.constant 0 : i32
    %c0_i32_0 = arith.constant 0 : i32
    %c0_i32_1 = arith.constant 0 : i32
    return %c0_i32, %c0_i32_0 : i32, i32
  }
  func.func @transform_1(%arg0: i32) -> (i32, i32, i32) {
    %c0_i32 = arith.constant 0 : i32
    %c0_i32_0 = arith.constant 0 : i32
    %c0_i32_1 = arith.constant 0 : i32
    return %arg0, %c0_i32, %c0_i32_0 : i32, i32, i32
  }
  func.func @transform_2(%arg0: i32) -> (i32, i32) {
    %c0_i32 = arith.constant 0 : i32
    %c0_i32_0 = arith.constant 0 : i32
    %c0_i32_1 = arith.constant 0 : i32
    return %c0_i32, %c0_i32_0 : i32, i32
  }
  func.func @transform_3(%arg0: i32) -> (i32, i32) {
    %c0_i32 = arith.constant 0 : i32
    %c0_i32_0 = arith.constant 0 : i32
    %c0_i32_1 = arith.constant 0 : i32
    return %c0_i32, %c0_i32_0 : i32, i32
  }
  func.func @transform_4(%arg0: i32) -> (i32, i32, i32) {
    %c0_i32 = arith.constant 0 : i32
    %c0_i32_0 = arith.constant 0 : i32
    %c0_i32_1 = arith.constant 0 : i32
    return %arg0, %c0_i32, %c0_i32_0 : i32, i32, i32
  }
}

</mosaic_0001>

<llo_original>
// kernel: tpu_custom_call.1
$region0: #{tpu_custom_call.1}
  #allocation0 [shape = 'u32[]', space=smem, size = 0x4, offset = 0x4, fixed_abs, tag = 'smem constant byte address 0x4 - core index']
  #allocation1 [shape = 'u32[72,128]{1,0:T(1,128)}', space=vmem, size = 0x9000, scoped, tag = 'internal scratch']
  #allocation2 [shape = 'f32[1,1]{1,0:T(1,128)S(6)}', space=smem, size = 0x200, scoped, tag = 'scoped memory for tpu_custom_call.1']
  %s0 = inlined_call_operand.<no memory space> [shape: f32[1,1], index: 0, kind: input, shape index: {}]
  %s1 = inlined_call_operand.vmem [shape: f32[2,8,32], index: 1, kind: input, shape index: {}]
  %s2 = inlined_call_operand.vmem [shape: f32[32,16], index: 2, kind: input, shape index: {}]
  %s3 = inlined_call_operand.vmem [shape: f32[1,16], index: 3, kind: input, shape index: {}]
  %s4 = inlined_call_operand.hbm [shape: f32[2,8,16], index: 4, kind: output, shape index: {}]
  %s5 = sld [smem:[#allocation0]]
  $region49: #{tpu_custom_call.1} parent=0
    _
  %s7 = ssub.s32 1, %s5
  %s8 = scalar_select 0, %s7, %s5
  %9 = sst [smem:[#allocation2]] %s0
  $region1: #{tpu_custom_call.1} parent=0
    #allocation3 [shape = 'u8[8192]{0}', space=vmem, size = 0x2000, scoped, tag = 'output window, operand 0']
    #allocation4 [shape = 's32[2]{0}', space=sflag, size = 0x8, scoped, tag = 'scoped memory for tpu_custom_call.1']
    %10 = vsyncpa [#allocation4], 0
    %s11 = scalar_lea.sflag [#allocation4], 1
    %12 = vsyncpa %s11, 0
    loop: start=0, step=1, limit=4
    $region2: #{tpu_custom_call.1} parent=1 // loop_pre_header
      _
    $region3: #{tpu_custom_call.1} parent=1 // loop_header
      %s14 = sphi 0, %s18
      %p15 = scmp.ge.s32.totalorder %s14, 4
      %s22 = sphi 0, %s22
      %s24 = sphi 0, %s22
      %s25 = sphi 0, %s24
      %s39 = sphi 0, %s25
      %s45 = sphi 0, %s47
      %s48 = sphi 0, %s45
      %s49 = sphi 0, %s48
      %s65 = sphi 0, %s49
      %s69 = sphi 0, %s69
      %s71 = sphi 0, %s69
      %s72 = sphi 0, %s71
      %s86 = sphi 0, %s72
      %s90 = sphi 0, %s90
      %s92 = sphi 0, %s90
      %s93 = sphi 0, %s92
      %s107 = sphi 0, %s93
      %s113 = sphi 0, %s115
      %s116 = sphi 0, %s113
      %s117 = sphi 0, %s116
      %s133 = sphi 0, %s117
    $region4: #{tpu_custom_call.1} parent=1 // loop_header_branch
      %17 = sbr.rel (%p15) target = $region8
    $region5: #{tpu_custom_call.1} parent=1 // loop_body
      %s19 = ssub.s32 %s14, 1
      %s20 = ssub.s32 %s14, 2
      %s21 = sadd.s32 %s14, 1
      %s23 = sadd.s32 %s22, 1
      %p26 = scmp.eq.s32.totalorder %s14, 1
      %p27 = scmp.ne.s32.totalorder %s22, %s24
      %p28 = scmp.eq.s32.totalorder %s14, 0
      %p29 = por %p27, %p28
      %p30 = scmp.ne.s32.totalorder %s22, %s24
      %p31 = scmp.eq.s32.totalorder %s19, 1
      %p32 = por %p30, %p31
      %p33 = scmp.ne.s32.totalorder %s24, %s25
      %p34 = scmp.eq.s32.totalorder %s19, 0
      %p35 = por %p33, %p34
      %p36 = scmp.ne.s32.totalorder %s24, %s25
      %p37 = scmp.eq.s32.totalorder %s20, 1
      %p38 = por %p36, %p37
      %p40 = scmp.ne.s32.totalorder %s25, %s39
      %p41 = scmp.eq.s32.totalorder %s20, 0
      %p42 = por %p40, %p41
      %s43 = ssub.s32 %s14, %s21
      %p44 = scmp.eq.s32.totalorder %s43, 0
      %s46 = sadd.s32 %s45, 1
      %s47 = scalar_select %p44, %s45, %s46
      %p50 = pneg %p44
      %p51 = scmp.eq.s32.totalorder %s14, 1
      %p52 = por %p50, %p51
      %p53 = scmp.ne.s32.totalorder %s45, %s48
      %p54 = scmp.eq.s32.totalorder %s14, 0
      %p55 = por %p53, %p54
      %p56 = scmp.ne.s32.totalorder %s45, %s48
      %p57 = scmp.eq.s32.totalorder %s19, 1
      %p58 = por %p56, %p57
      %p59 = scmp.ne.s32.totalorder %s48, %s49
      %p60 = scmp.eq.s32.totalorder %s19, 0
      %p61 = por %p59, %p60
      %p62 = scmp.ne.s32.totalorder %s48, %s49
      %p63 = scmp.eq.s32.totalorder %s20, 1
      %p64 = por %p62, %p63
      %p66 = scmp.ne.s32.totalorder %s49, %s65
      %p67 = scmp.eq.s32.totalorder %s20, 0
      %p68 = por %p66, %p67
      %s70 = sadd.s32 %s69, 1
      %p73 = scmp.eq.s32.totalorder %s14, 1
      %p74 = scmp.ne.s32.totalorder %s69, %s71
      %p75 = scmp.eq.s32.totalorder %s14, 0
      %p76 = por %p74, %p75
      %p77 = scmp.ne.s32.totalorder %s69, %s71
      %p78 = scmp.eq.s32.totalorder %s19, 1
      %p79 = por %p77, %p78
      %p80 = scmp.ne.s32.totalorder %s71, %s72
      %p81 = scmp.eq.s32.totalorder %s19, 0
      %p82 = por %p80, %p81
      %p83 = scmp.ne.s32.totalorder %s71, %s72
      %p84 = scmp.eq.s32.totalorder %s20, 1
      %p85 = por %p83, %p84
      %p87 = scmp.ne.s32.totalorder %s72, %s86
      %p88 = scmp.eq.s32.totalorder %s20, 0
      %p89 = por %p87, %p88
      %s91 = sadd.s32 %s90, 1
      %p94 = scmp.eq.s32.totalorder %s14, 1
      %p95 = scmp.ne.s32.totalorder %s90, %s92
      %p96 = scmp.eq.s32.totalorder %s14, 0
      %p97 = por %p95, %p96
      %p98 = scmp.ne.s32.totalorder %s90, %s92
      %p99 = scmp.eq.s32.totalorder %s19, 1
      %p100 = por %p98, %p99
      %p101 = scmp.ne.s32.totalorder %s92, %s93
      %p102 = scmp.eq.s32.totalorder %s19, 0
      %p103 = por %p101, %p102
      %p104 = scmp.ne.s32.totalorder %s92, %s93
      %p105 = scmp.eq.s32.totalorder %s20, 1
      %p106 = por %p104, %p105
      %p108 = scmp.ne.s32.totalorder %s93, %s107
      %p109 = scmp.eq.s32.totalorder %s20, 0
      %p110 = por %p108, %p109
      %s111 = ssub.s32 %s14, %s21
      %p112 = scmp.eq.s32.totalorder %s111, 0
      %s114 = sadd.s32 %s113, 1
      %s115 = scalar_select %p112, %s113, %s114
      %p118 = pneg %p112
      %p119 = scmp.eq.s32.totalorder %s14, 1
      %p120 = por %p118, %p119
      %p121 = scmp.ne.s32.totalorder %s113, %s116
      %p122 = scmp.eq.s32.totalorder %s14, 0
      %p123 = por %p121, %p122
      %p124 = scmp.ne.s32.totalorder %s113, %s116
      %p125 = scmp.eq.s32.totalorder %s19, 1
      %p126 = por %p124, %p125
      %p127 = scmp.ne.s32.totalorder %s116, %s117
      %p128 = scmp.eq.s32.totalorder %s19, 0
      %p129 = por %p127, %p128
      %p130 = scmp.ne.s32.totalorder %s116, %s117
      %p131 = scmp.eq.s32.totalorder %s20, 1
      %p132 = por %p130, %p131
      %p134 = scmp.ne.s32.totalorder %s117, %s133
      %p135 = scmp.eq.s32.totalorder %s20, 0
      %p136 = por %p134, %p135
      %p137 = scmp.le.s32.totalorder 1, %s14
      %p138 = scmp.lt.s32.totalorder %s14, 3
      %p139 = pnand %p137, %p138
      %p140 = pneg %p139
      // Predicated region
      $region9: #{tpu_custom_call.1} parent=5 // pred_check
        _
      $region10: #{tpu_custom_call.1} parent=5 // pred_check_branch
        %142 = sbr.rel (%p139) target = $region12
      $region11: #{tpu_custom_call.1} parent=5 // pred_region
        %s143 = ssub.s32 %s14, 1
        // Predicated region
        $region13: #{tpu_custom_call.1} parent=11 // pred_check
          %p144 = pneg %p35
        $region14: #{tpu_custom_call.1} parent=11 // pred_check_branch
          %146 = sbr.rel (%p144) target = $region16
        $region15: #{tpu_custom_call.1} parent=11 // pred_region
          _
        $region16: #{tpu_custom_call.1} parent=11 // pred_fallthru
          _
        // Predicated region
        $region17: #{tpu_custom_call.1} parent=11 // pred_check
          %p147 = pneg %p82
        $region18: #{tpu_custom_call.1} parent=11 // pred_check_branch
          %149 = sbr.rel (%p147) target = $region20
        $region19: #{tpu_custom_call.1} parent=11 // pred_region
          _
        $region20: #{tpu_custom_call.1} parent=11 // pred_fallthru
          _
        // Predicated region
        $region21: #{tpu_custom_call.1} parent=11 // pred_check
          %p150 = pneg %p103
        $region22: #{tpu_custom_call.1} parent=11 // pred_check_branch
          %152 = sbr.rel (%p150) target = $region24
        $region23: #{tpu_custom_call.1} parent=11 // pred_region
          _
        $region24: #{tpu_custom_call.1} parent=11 // pred_fallthru
          _
      $region12: #{tpu_custom_call.1} parent=5 // pred_fallthru
        _
      %p153 = scmp.lt.s32.totalorder %s14, 2
      // Predicated region
      $region25: #{tpu_custom_call.1} parent=5 // pred_check
        %p154 = pneg %p153
      $region26: #{tpu_custom_call.1} parent=5 // pred_check_branch
        %156 = sbr.rel (%p154) target = $region28
      $region27: #{tpu_custom_call.1} parent=5 // pred_region
        // Predicated region
        $region29: #{tpu_custom_call.1} parent=27 // pred_check
          %p157 = pneg %p55
        $region30: #{tpu_custom_call.1} parent=27 // pred_check_branch
          %159 = sbr.rel (%p157) target = $region32
        $region31: #{tpu_custom_call.1} parent=27 // pred_region
          %p160 = scmp.lt.s32.totalorder %s14, 1
          %s161 = scalar_select %p160, %s14, 1
          %s162 = smul.addr %s161, 8
          %s163 = scalar_lea.vmem %s1, %s162
        $region32: #{tpu_custom_call.1} parent=27 // pred_fallthru
          _
      $region28: #{tpu_custom_call.1} parent=5 // pred_fallthru
        _
      %p164 = scmp.le.s32.totalorder 1, %s14
      %p165 = scmp.lt.s32.totalorder %s14, 3
      %p166 = pnand %p164, %p165
      %p167 = pneg %p166
      // Predicated region
      $region33: #{tpu_custom_call.1} parent=5 // pred_check
        _
      $region34: #{tpu_custom_call.1} parent=5 // pred_check_branch
        %169 = sbr.rel (%p166) target = $region36
      $region35: #{tpu_custom_call.1} parent=5 // pred_region
        %s170 = ssub.s32 %s14, 1
        %p171 = pneg %p35
        %p172 = pneg %p32
        %p173 = scmp.lt.s32.totalorder %s19, 1
        %s174 = scalar_select %p173, %s19, 1
        %s175 = smul.addr %s174, 8
        %s176 = scalar_lea.vmem %s1, %s175
        %p177 = pneg %p61
        %p178 = pneg %p58
        %p179 = pneg %p82
        %p180 = pneg %p79
        %p181 = pneg %p103
        %p182 = pneg %p100
        %p183 = pneg %p129
        %p184 = pneg %p126
        %s185 = sand.u32 %s116, 1
        %s186 = scalar_lea.sflag [#allocation4], %s185
        %s187 = sand.u32 %s116, 1
        %s188 = smul.addr %s187, 8
        %s189 = scalar_lea.vmem [#allocation3], %s188
        %p190 = scmp.lt.s32.totalorder %s19, 1
        %s191 = scalar_select %p190, %s19, 1
        %s192 = smul.addr %s191, 8
        %s193 = scalar_lea.vmem %s1, %s192
        %v194 = vld [vmem:[%s193] sm:$0xff]
        %v195 = vld [vmem:[%s2] sm:$0xff]
        %v196 = vld [vmem:[%s2 + $0x8] sm:$0xff]
        %v197 = vld [vmem:[%s2 + $0x10] sm:$0xff]
        %v198 = vld [vmem:[%s2 + $0x18] sm:$0xff]
        %vm199 = vcmask 261120
        %v200 = vsel %vm199, %v194, -inf
        %201 = vmax.xlane.f32.xlu0 %v200
        %v202 = vpop.xlane.xlu0 %201
        %v203 = vrot.slane %v202, 4
        %v204 = vmax.f32 %v202, %v203
        %v205 = vrot.slane %v204, 2
        %v206 = vmax.f32 %v204, %v205
        %v207 = vrot.slane %v206, 1
        %v208 = vmax.f32 %v206, %v207
        %v210 = vsel %vm199, %v194, 0
        %212 = vmatpush.msra.mxu0 0.0
        %213 = vmatpush.msra.mxu0 0.0
        %214 = vmatpush.msra.mxu0 0.0
        %215 = vmatpush.msra.mxu0 0.0
        %216 = vmatpush.msra.mxu0 0.0
        %217 = vmatpush.msra.mxu0 0.0
        %218 = vmatpush.msra.mxu0 0.0
        %219 = vmatpush.msra.mxu0 0.0
        %220 = vmatpush.msra.mxu0 0.0
        %221 = vmatpush.msra.mxu0 0.0
        %222 = vmatpush.msra.mxu0 0.0
        %223 = vmatpush.msra.mxu0 0.0
        %224 = vmatpush.msra.mxu0 %v198
        %225 = vmatpush.msra.mxu0 %v197
        %226 = vmatpush.msra.mxu0 %v196
        %227 = vmatpush.msra.mxu0 %v195
        %228 = vmatmul.f32.gmra.mxu0 %v210
        %v229 = vpop.f32.mrf.mxu0
        %v230 = vadd.f32 0.0, %v229
        %231 = vdwg.mxu0
        %v232 = vand.u32 2147483647, %v230
        %vm233 = vcmask 130048
        %v234 = vsel %vm233, %v232, -inf
        %235 = vmax.xlane.f32.xlu0 %v234
        %v236 = vpop.xlane.xlu0 %235
        %v237 = vrot.slane %v236, 4
        %v238 = vmax.f32 %v236, %v237
        %v239 = vrot.slane %v238, 2
        %v240 = vmax.f32 %v238, %v239
        %v241 = vrot.slane %v240, 1
        %v242 = vmax.f32 %v240, %v241
        %s243 = sld [smem:[#allocation2]]
        %v244 = vstv %s243
        %v245 = vmul.f32 %v208, %v244
        %v246 = vrcp.pop %v242
        %v247 = vmul.f32 %v242, %v246
        %v248 = vsub.f32 1.0, %v247
        %v249 = vmul.f32 %v246, %v248
        %v250 = vadd.f32 %v246, %v249
        %vm251 = vweird.f32 %v242
        %vm252 = vweird.f32 %v246
        %vm253 = vmor %vm251, %vm252
        %v254 = vsel %vm253, %v246, %v250
        %v255 = vand.u32 2147483647, %v242
        %vm256 = vcmp.eq.f32.partialorder %v255, 8.507059e+37
        %v257 = vand.u32 %v242, 2147483648
        %v258 = vor.u32 1.1754944e-38, %v257
        %v259 = vsel %vm256, %v258, %v254
        %v260 = vmul.f32 %v245, %v259
        %v261 = vmul.f32 %v232, %v260
        %v262 = vld [vmem:[%s3] sm:$0x1]
        %v264 = vperm.slane %v262, 0
        %v266 = vadd.f32 %v261, %v264
        %267 = vst.msk [vmem:[%s189] sm:$0xff] %vm233, %v266
        %s268 = sand.u32 %s116, 1
        %s269 = scalar_lea.sflag [#allocation4], %s268
        %s270 = sand.u32 %s116, 1
        %s271 = smul.addr %s270, 8
        %s272 = scalar_lea.vmem [#allocation3], %s271
        // Predicated region
        $region37: #{tpu_custom_call.1} parent=35 // pred_check
          %p273 = pneg %p126
        $region38: #{tpu_custom_call.1} parent=35 // pred_check_branch
          %275 = sbr.rel (%p273) target = $region40
        $region39: #{tpu_custom_call.1} parent=35 // pred_region
          %277 = vsyncadd %s269, 0
          %s278 = smul.addr %s19, 8
          %s279 = scalar_lea.hbm %s4, %s278
          %s281 = sshll.u32 %s272, 4
          %s282 = int_to_ptr.vmem [resolvable:$true] %s281
          %s283 = sshll.u32 %s279, 4
          %s284 = int_to_ptr.hbm [resolvable:$true] %s283
          %286 = dma.vmem_to_hbm [thread:$0]  %s282, 128, %s284, %s269
        $region40: #{tpu_custom_call.1} parent=35 // pred_fallthru
          _
      $region36: #{tpu_custom_call.1} parent=5 // pred_fallthru
        _
      %p287 = scmp.le.s32.totalorder 2, %s14
      // Predicated region
      $region41: #{tpu_custom_call.1} parent=5 // pred_check
        %p288 = pneg %p287
      $region42: #{tpu_custom_call.1} parent=5 // pred_check_branch
        %290 = sbr.rel (%p288) target = $region44
      $region43: #{tpu_custom_call.1} parent=5 // pred_region
        %s291 = ssub.s32 %s14, 2
        // Predicated region
        $region45: #{tpu_custom_call.1} parent=43 // pred_check
          %p292 = pneg %p132
        $region46: #{tpu_custom_call.1} parent=43 // pred_check_branch
          %294 = sbr.rel (%p292) target = $region48
        $region47: #{tpu_custom_call.1} parent=43 // pred_region
          %s295 = sand.u32 %s117, 1
          %s296 = scalar_lea.sflag [#allocation4], %s295
          %s297 = sand.u32 %s117, 1
          %s298 = smul.addr %s297, 8
          %s299 = scalar_lea.vmem [#allocation3], %s298
          %301 = dma.done %s296, 128
        $region48: #{tpu_custom_call.1} parent=43 // pred_fallthru
          _
      $region44: #{tpu_custom_call.1} parent=5 // pred_fallthru
        _
    $region6: #{tpu_custom_call.1} parent=1 // loop_footer
      %s18 = sadd.s32 1, %s14
    $region7: #{tpu_custom_call.1} parent=1 // loop_footer_branch
      %13 = sbr.rel target = $region3
    $region8: #{tpu_custom_call.1} parent=1 // loop_exit
      _
    %302 = vsyncpa [#allocation4], 1
    %s303 = scalar_lea.sflag [#allocation4], 1
    %304 = vsyncpa %s303, 1

</llo_original>
